<compile_context>
chip_gen: v6e
topology: v6e:2x2x1
jax: 0.10.0
libtpu: 0.0.40
codegen_flags: <defaults>
</compile_context>

<pallas_src>
import jax
import jax.numpy as jnp
from jax.experimental import pallas as pl
from jax.experimental.pallas import tpu as pltpu

MIN_NORM = 1e-15
BALL_EPS_F32 = 0.004  # BALL_EPS[torch.float32]


# ----------------------------------------------------------------------------------
# Small hyperbolic helpers used in the per-triplet glue (pure JAX, O(B*rank))
# ----------------------------------------------------------------------------------
def _tanh(x):
    return jnp.tanh(jnp.clip(x, -15.0, 15.0))


def project(x, c):
    norm = jnp.maximum(jnp.sqrt(jnp.sum(x * x, axis=-1, keepdims=True)), MIN_NORM)
    maxnorm = (1.0 - BALL_EPS_F32) / jnp.sqrt(c)
    cond = norm > maxnorm
    projected = x / norm * maxnorm
    return jnp.where(cond, projected, x)


def expmap0(u, c):
    sqrt_c = jnp.sqrt(c)
    u_norm = jnp.maximum(jnp.sqrt(jnp.sum(u * u, axis=-1, keepdims=True)), MIN_NORM)
    gamma_1 = _tanh(sqrt_c * u_norm) * u / (sqrt_c * u_norm)
    return project(gamma_1, c)


def mobius_add(x, y, c):
    x2 = jnp.sum(x * x, axis=-1, keepdims=True)
    y2 = jnp.sum(y * y, axis=-1, keepdims=True)
    xy = jnp.sum(x * y, axis=-1, keepdims=True)
    num = (1.0 + 2.0 * c * xy + c * y2) * x + (1.0 - c * x2) * y
    denom = 1.0 + 2.0 * c * xy + c ** 2 * x2 * y2
    return num / jnp.maximum(denom, MIN_NORM)


def givens_rotations(r, x):
    b = r.shape[0]
    g = r.reshape(b, -1, 2)
    g = g / jnp.maximum(jnp.sqrt(jnp.sum(g * g, axis=-1, keepdims=True)), 1e-15)
    xr = x.reshape(b, -1, 2)
    x_rot = g[:, :, 0:1] * xr + g[:, :, 1:] * jnp.concatenate(
        (-xr[:, :, 1:], xr[:, :, 0:1]), axis=-1
    )
    return x_rot.reshape(b, -1)


# ----------------------------------------------------------------------------------
# Pallas kernel: fused gate-folded (complex+Euclid) matmul + optional hyperbolic
# expert, for one entity tile.
#   sel_ref (SMEM, scalar-prefetched, int32[2]):
#     sel[0] = 1 iff any row picked expert 0 or 1 (complex / Euclidean)
#     sel[1] = 1 iff any row picked expert 2 (hyperbolic)
# ----------------------------------------------------------------------------------
def chooser_kernel(sel_ref, qcr_ref, entcr_ref, x_ref, enth_ref,
                   entscal_ref, rowscal_ref, out_ref):
    dims = (((1,), (1,)), ((), ()))  # contract last dim of both operands (A @ B.T)
    use_cr = sel_ref[0] != 0
    use_h = sel_ref[1] != 0

    # Fused complex + Euclidean experts; hard one-hot gate is folded into the LHS
    # (g0*q_c | g1*q_r), so one MXU launch yields g0*s_c + g1*s_r directly (exact,
    # since g0/g1 are 0/1).
    @pl.when(use_cr)
    def _():
        out_ref[...] = jax.lax.dot_general(qcr_ref[...], entcr_ref[...], dims,
                                           preferred_element_type=jnp.float32)

    @pl.when(jnp.logical_not(use_cr))
    def _():
        out_ref[...] = jnp.zeros_like(out_ref)

    @pl.when(use_h)  # hyperbolic expert selected by >= 1 row
    def _():
        x = x_ref[...]                # (B, rank)  bf16
        v = enth_ref[...]             # (TE, rank) bf16
        es = entscal_ref[...]         # (2, TE) f32: [vnorm, 1/max(vnorm, MIN_NORM)]
        rs = rowscal_ref[...]         # (B, 6) f32: [c, sqrt_c, 1/c, 1/sqrt_c, x2, g2]
        vnorm, inv_vnorm = es[0:1, :], es[1:2, :]
        c = rs[:, 0:1]
        sqrt_c = rs[:, 1:2]
        inv_c = rs[:, 2:3]
        inv_sqrt_c = rs[:, 3:4]
        x2 = rs[:, 4:5]
        g2 = rs[:, 5:6]

        # -hyp_distance_multi_c(res2, ent_hyper, c)^2, elementwise math in f32.
        xv = jax.lax.dot_general(x, v, dims,
                                 preferred_element_type=jnp.float32) * inv_vnorm
        gamma = jnp.tanh(jnp.clip(sqrt_c * vnorm, -15.0, 15.0)) * inv_sqrt_c
        cg = c * gamma
        c1 = 1.0 - 2.0 * cg * xv + cg * gamma
        t = (1.0 - c * x2) * gamma                    # c2 * gamma
        num_sq = c1 * c1 * x2 + t * t - 2.0 * c1 * t * xv
        num = jnp.sqrt(jnp.maximum(num_sq, 0.0))      # clamp fp-cancellation negatives
        denom = 1.0 - 2.0 * cg * xv + cg * cg * x2
        pairwise = num * pl.reciprocal(jnp.maximum(denom, MIN_NORM), approx=True)
        z = jnp.clip(sqrt_c * pairwise, -1.0 + 1e-5, 1.0 - 1e-5)
        # TODO(synk): torch Artanh upcasts to float64; single-log f32 artanh here.
        dist = 0.5 * jnp.log((1.0 + z) / (1.0 - z))
        s_h = -4.0 * dist * dist * inv_c              # -(2*dist/sqrt_c)^2
        out_ref[...] = out_ref[...] + g2 * s_h


def mixture_scores(sel, q_cr, ent_cr, res2, ent_h, ent_scal, row_scal,
                   e_tile=None, vmem_budget_bytes=16 * 1024 * 1024):
    B, dcr = q_cr.shape
    E = ent_cr.shape[0]
    rank = res2.shape[1]

    # Bytes per entity row of double-buffered streams: bf16 tables, 2 f32 scalars,
    # f32 output rows.
    bytes_per_ent = 2 * dcr + 2 * rank + 2 * 4 + 4 * B
    if e_tile is None:
        # Largest tile (<= 2048, multiple of 128) whose double-buffered entity
        # streams fit a conservative VMEM budget (safe on v5e/v6e/v7x).
        cap = 2048
        while cap > 128 and 2 * cap * bytes_per_ent > vmem_budget_bytes:
            cap -= 128
        e_tile = min(cap, ((E + 127) // 128) * 128)
    e_tile = max(128, (e_tile // 128) * 128)

    # Pad the entity axis to a multiple of e_tile (padded cols sliced off below;
    # padded rows stay finite in the kernel since inv_vnorm pads with 0).
    E_pad = ((E + e_tile - 1) // e_tile) * e_tile
    if E_pad != E:
        pad = E_pad - E
        ent_cr = jnp.pad(ent_cr, ((0, pad), (0, 0)))
        ent_h = jnp.pad(ent_h, ((0, pad), (0, 0)))
        ent_scal = jnp.pad(ent_scal, ((0, 0), (0, pad)))

    grid = (E_pad // e_tile,)

    # Index maps: entity-table streams are gated on the scalar-prefetched expert
    # selection — if an expert is never selected, its stream collapses to block 0
    # for every grid step (Pallas elides the repeat DMA), saving the HBM bytes.
    out = pl.pallas_call(
        chooser_kernel,
        out_shape=jax.ShapeDtypeStruct((B, E_pad), jnp.float32),
        grid_spec=pltpu.PrefetchScalarGridSpec(
            num_scalar_prefetch=1,            # sel -> SMEM
            grid=grid,
            in_specs=[
                pl.BlockSpec((B, dcr),       lambda j, s: (0, 0)),          # q_cr (bf16)
                pl.BlockSpec((e_tile, dcr),  lambda j, s: (j * s[0], 0)),   # ent_cr (bf16)
                pl.BlockSpec((B, rank),      lambda j, s: (0, 0)),          # res2 (bf16)
                pl.BlockSpec((e_tile, rank), lambda j, s: (j * s[1], 0)),   # ent_h (bf16)
                pl.BlockSpec((2, e_tile),    lambda j, s: (0, j * s[1])),   # [vnorm; 1/vnorm]
                pl.BlockSpec((B, 6),         lambda j, s: (0, 0)),          # per-row scalars
            ],
            out_specs=pl.BlockSpec((B, e_tile), lambda j, s: (0, j)),
        ),
        compiler_params=pltpu.CompilerParams(
            dimension_semantics=("parallel",),     # shard E tiles across TCs (v7x)
            vmem_limit_bytes=32 * 1024 * 1024,
        ),
    )(sel, q_cr, ent_cr, res2, ent_h, ent_scal, row_scal)
    return out[:, :E]


# ----------------------------------------------------------------------------------
# Full forward (glue + kernel)
# ----------------------------------------------------------------------------------
def geometric_chooser_forward(params, ent_embs, rel_embs, triplets, key):
    dim = params["dim_str"]
    rank = dim // 2
    h, r = triplets[:, 0], triplets[:, 1]

    def linear(x, W, b):
        return x @ W.T + b

    # ---- gate: Linear + hard gumbel-softmax (forward value = one-hot argmax) ----
    lhs0 = ent_embs[h]
    rel0 = rel_embs[r]
    combine = jnp.concatenate([lhs0, rel0], axis=1)
    gate_logits = linear(combine, params["gate_W"], params["gate_b"])
    gumbel = jax.random.gumbel(key, gate_logits.shape, dtype=gate_logits.dtype)
    gate_probs = jax.nn.one_hot(jnp.argmax((gate_logits + gumbel) / 1.0, axis=-1),
                                3, dtype=jnp.float32)
    g0, g1, g2 = gate_probs[:, 0:1], gate_probs[:, 1:2], gate_probs[:, 2:3]

    imp = gate_probs.sum(axis=0)
    mean_imp = imp.mean()
    std_imp = imp.std(ddof=1)                      # torch.std default (unbiased)
    cv2 = jnp.where(mean_imp != 0, (std_imp / mean_imp) ** 2, 0.0)
    aux_loss = 1.0 * cv2

    # ---- complex expert query ----
    ent_c = linear(ent_embs, params["ec_W"], params["ec_b"])
    rel_c = linear(rel_embs, params["rc_W"], params["rc_b"])
    lc, rc = ent_c[h], rel_c[r]
    l0, l1 = lc[:, :rank], lc[:, rank:]
    r0, r1 = rc[:, :rank], rc[:, rank:]
    q_c = jnp.concatenate([l0 * r0 - l1 * r1, l0 * r1 + l1 * r0], axis=1)

    # ---- Euclidean expert query ----
    ent_r = linear(ent_embs, params["er_W"], params["er_b"])
    rel_r = linear(rel_embs, params["rr_W"], params["rr_b"])
    q_r = ent_r[h] * rel_r[r]

    # Gate-folded fused complex+Euclid streams (bf16 halves HBM bytes; exact fold
    # since the gate is a hard one-hot).
    q_cr = jnp.concatenate([g0 * q_c, g1 * q_r], axis=1).astype(jnp.bfloat16)
    ent_cr = jnp.concatenate([ent_c, ent_r], axis=1).astype(jnp.bfloat16)

    # ---- hyperbolic expert pre-processing (per triplet, O(B*rank)) ----
    ent_h = linear(0.01 * ent_embs, params["eh_W"], params["eh_b"])   # (E, rank)
    rel_h = linear(0.01 * rel_embs, params["rh_W"], params["rh_b"])   # (R, dim)
    lhs_h = ent_h[h]
    rel_ht = rel_h[r]
    c = jax.nn.softplus(params["c"][r])                               # (B, 1)
    head = expmap0(lhs_h, c)
    rel1, rel2 = rel_ht[:, :rank], rel_ht[:, rank:]
    rel1 = expmap0(rel1, c)
    rel2 = expmap0(rel2, c)
    lhs_p = project(mobius_add(head, rel1, c), c)
    res1 = givens_rotations(params["rel_diag"][r], lhs_p)
    res2 = mobius_add(res1, rel2, c)

    # Hoisted per-entity / per-row scalars (f32), incl. precomputed reciprocals so
    # the kernel never divides on the EUP hot path except artanh itself.
    vnorm = jnp.sqrt(jnp.sum(ent_h * ent_h, axis=-1))                 # (E,)
    inv_vnorm = 1.0 / jnp.maximum(vnorm, MIN_NORM)
    ent_scal = jnp.stack([vnorm, inv_vnorm], axis=0)                  # (2, E)

    sqrt_c = jnp.sqrt(c)
    x2 = jnp.sum(res2 * res2, axis=-1, keepdims=True)
    row_scal = jnp.concatenate(
        [c, sqrt_c, 1.0 / c, 1.0 / sqrt_c, x2, g2], axis=1)           # (B, 6)

    # Which experts are used at all (hard one-hot gate) -> scalar prefetch mask.
    # sel[0]: complex-or-Euclid stream needed; sel[1]: hyperbolic stream needed.
    expert_mask = (gate_probs.sum(axis=0) > 0.0).astype(jnp.int32)    # (3,)
    sel = jnp.stack([jnp.maximum(expert_mask[0], expert_mask[1]),
                     expert_mask[2]]).astype(jnp.int32)               # (2,)

    out = mixture_scores(sel, q_cr, ent_cr,
                         res2.astype(jnp.bfloat16), ent_h.astype(jnp.bfloat16),
                         ent_scal, row_scal)
    return out, aux_loss


# ----------------------------------------------------------------------------------
# Deterministic parameter init (shapes from Geometric_Chooser.__init__)
# ----------------------------------------------------------------------------------
def init_params(key, dim_str, num_rel, num_experts=3):
    rank = dim_str // 2
    keys = jax.random.split(key, 8)

    def lin(k, out_f, in_f):
        k1, k2 = jax.random.split(k)
        bound = 1.0 / (in_f ** 0.5)
        W = jax.random.uniform(k1, (out_f, in_f), minval=-bound, maxval=bound,
                               dtype=jnp.float32)
        b = jax.random.uniform(k2, (out_f,), minval=-bound, maxval=bound,
                               dtype=jnp.float32)
        return W, b

    p = {"dim_str": dim_str}
    p["gate_W"], p["gate_b"] = lin(keys[0], num_experts, dim_str * 2)
    p["ec_W"], p["ec_b"] = lin(keys[1], dim_str, dim_str)      # ent_to_complex
    p["er_W"], p["er_b"] = lin(keys[2], dim_str, dim_str)      # ent_to_real
    p["rc_W"], p["rc_b"] = lin(keys[3], dim_str, dim_str)      # rel_to_complex
    p["rr_W"], p["rr_b"] = lin(keys[4], dim_str, dim_str)      # rel_to_real
    p["eh_W"], p["eh_b"] = lin(keys[5], rank, dim_str)         # ent_to_hyper
    p["rh_W"], p["rh_b"] = lin(keys[6], dim_str, dim_str)      # rel_to_hyper
    p["rel_diag"] = 2.0 * jax.random.uniform(keys[7], (num_rel, rank),
                                             dtype=jnp.float32) - 1.0
    p["c"] = jnp.ones((num_rel, 1), dtype=jnp.float32)
    return p


if __name__ == "__main__":
    key = jax.random.PRNGKey(0)
    k_p, k_e, k_r, k_h, k_rr, k_t, k_g = jax.random.split(key, 7)

    dim_str, num_rel, num_ent, B = 32, 16, 256, 8

    params = init_params(k_p, dim_str, num_rel)
    ent_embs = jax.random.normal(k_e, (num_ent, dim_str), dtype=jnp.float32)
    rel_embs = jax.random.normal(k_r, (num_rel, dim_str), dtype=jnp.float32)
    heads = jax.random.randint(k_h, (B,), 0, num_ent)
    rels = jax.random.randint(k_rr, (B,), 0, num_rel)
    tails = jax.random.randint(k_t, (B,), 0, num_ent)
    triplets = jnp.stack([heads, rels, tails], axis=1).astype(jnp.int32)

    out, aux_loss = geometric_chooser_forward(params, ent_embs, rel_embs, triplets, k_g)
    jax.block_until_ready(out)
    jax.block_until_ready(aux_loss)
    assert out.shape == (B, num_ent) and out.dtype == jnp.float32
    assert bool(jnp.all(jnp.isfinite(out)))
    print("KERNEL_OK")
</pallas_src>

<mosaic_0001>
module attributes {stable_mosaic.version = 11 : i64} {
  func.func @chooser_kernel(%arg0: i32, %arg1: memref<2xi32, #tpu.memory_space<smem>>, %arg2: memref<8x64xbf16, #tpu.memory_space<vmem>>, %arg3: memref<256x64xbf16, #tpu.memory_space<vmem>>, %arg4: memref<8x16xbf16, #tpu.memory_space<vmem>>, %arg5: memref<256x16xbf16, #tpu.memory_space<vmem>>, %arg6: memref<2x256xf32, #tpu.memory_space<vmem>>, %arg7: memref<8x6xf32, #tpu.memory_space<vmem>>, %arg8: memref<8x256xf32, #tpu.memory_space<vmem>>) attributes {dimension_semantics = [#tpu.dimension_semantics<parallel>], iteration_bounds = array<i64: 1>, scalar_prefetch = 1 : i64, scratch_operands = 0 : i64, tpu.core_type = #tpu.core_type<tc>, window_params = [{pipeline_mode = #tpu.pipeline_mode<synchronous>, transform_indices = @transform_0, window_bounds = array<i64: 8, 64>}, {transform_indices = @transform_1, window_bounds = array<i64: 256, 64>}, {pipeline_mode = #tpu.pipeline_mode<synchronous>, transform_indices = @transform_2, window_bounds = array<i64: 8, 16>}, {transform_indices = @transform_3, window_bounds = array<i64: 256, 16>}, {transform_indices = @transform_4, window_bounds = array<i64: 2, 256>}, {pipeline_mode = #tpu.pipeline_mode<synchronous>, transform_indices = @transform_5, window_bounds = array<i64: 8, 6>}, {transform_indices = @transform_6, window_bounds = array<i64: 8, 256>}]} {
    %c0 = arith.constant 0 : index
    %0 = memref.load %arg1[%c0] : memref<2xi32, #tpu.memory_space<smem>>
    %c0_i32 = arith.constant 0 : i32
    %1 = arith.cmpi ne, %0, %c0_i32 : i32
    %c1 = arith.constant 1 : index
    %2 = memref.load %arg1[%c1] : memref<2xi32, #tpu.memory_space<smem>>
    %c0_i32_0 = arith.constant 0 : i32
    %3 = arith.cmpi ne, %2, %c0_i32_0 : i32
    %4 = arith.extui %1 : i1 to i32
    %c0_i32_1 = arith.constant 0 : i32
    %5 = arith.cmpi ne, %4, %c0_i32_1 : i32
    scf.if %5 {
      %c0_4 = arith.constant 0 : index
      %c0_5 = arith.constant 0 : index
      %11 = vector.load %arg2[%c0_4, %c0_5] : memref<8x64xbf16, #tpu.memory_space<vmem>>, vector<8x64xbf16>
      %c0_6 = arith.constant 0 : index
      %c0_7 = arith.constant 0 : index
      %12 = vector.load %arg3[%c0_6, %c0_7] : memref<256x64xbf16, #tpu.memory_space<vmem>>, vector<256x64xbf16>
      %cst = arith.constant dense<0.000000e+00> : vector<8x256xf32>
      %13 = tpu.matmul %11, %12, %cst {dimension_numbers = #tpu.dot_dimension_numbers<[1], [1], [0], [0], [0, 0, 1, 0], [], []>} : vector<8x64xbf16>, vector<256x64xbf16>, vector<8x256xf32> -> vector<8x256xf32>
      %c0_8 = arith.constant 0 : index
      %c0_9 = arith.constant 0 : index
      %14 = vector.load %arg8[%c0_8, %c0_9] : memref<8x256xf32, #tpu.memory_space<vmem>>, vector<8x256xf32>
      tpu.vector_store %arg8[%c0_8, %c0_9], %13 {strides = array<i32>} : memref<8x256xf32, #tpu.memory_space<vmem>>, vector<8x256xf32>,
    } else {
    }
    %true = arith.constant true
    %6 = arith.xori %1, %true : i1
    %7 = arith.extui %6 : i1 to i32
    %c0_i32_2 = arith.constant 0 : i32
    %8 = arith.cmpi ne, %7, %c0_i32_2 : i32
    scf.if %8 {
      %cst = arith.constant 0.000000e+00 : f32
      %11 = vector.broadcast %cst : f32 to vector<8x256xf32>
      %c0_4 = arith.constant 0 : index
      %c0_5 = arith.constant 0 : index
      %12 = vector.load %arg8[%c0_4, %c0_5] : memref<8x256xf32, #tpu.memory_space<vmem>>, vector<8x256xf32>
      tpu.vector_store %arg8[%c0_4, %c0_5], %11 {strides = array<i32>} : memref<8x256xf32, #tpu.memory_space<vmem>>, vector<8x256xf32>,
    } else {
    }
    %9 = arith.extui %3 : i1 to i32
    %c0_i32_3 = arith.constant 0 : i32
    %10 = arith.cmpi ne, %9, %c0_i32_3 : i32
    scf.if %10 {
      %c0_4 = arith.constant 0 : index
      %c0_5 = arith.constant 0 : index
      %11 = vector.load %arg4[%c0_4, %c0_5] : memref<8x16xbf16, #tpu.memory_space<vmem>>, vector<8x16xbf16>
      %c0_6 = arith.constant 0 : index
      %c0_7 = arith.constant 0 : index
      %12 = vector.load %arg5[%c0_6, %c0_7] : memref<256x16xbf16, #tpu.memory_space<vmem>>, vector<256x16xbf16>
      %c0_8 = arith.constant 0 : index
      %c0_9 = arith.constant 0 : index
      %13 = vector.load %arg6[%c0_8, %c0_9] : memref<2x256xf32, #tpu.memory_space<vmem>>, vector<2x256xf32>
      %c0_10 = arith.constant 0 : index
      %c0_11 = arith.constant 0 : index
      %14 = vector.load %arg7[%c0_10, %c0_11] : memref<8x6xf32, #tpu.memory_space<vmem>>, vector<8x6xf32>
      %15 = vector.extract_strided_slice %13 {offsets = [0, 0], sizes = [1, 256], strides = [1, 1]} : vector<2x256xf32> to vector<1x256xf32>
      %16 = vector.extract_strided_slice %13 {offsets = [1, 0], sizes = [1, 256], strides = [1, 1]} : vector<2x256xf32> to vector<1x256xf32>
      %17 = vector.extract_strided_slice %14 {offsets = [0, 0], sizes = [8, 1], strides = [1, 1]} : vector<8x6xf32> to vector<8x1xf32>
      %18 = vector.extract_strided_slice %14 {offsets = [0, 1], sizes = [8, 1], strides = [1, 1]} : vector<8x6xf32> to vector<8x1xf32>
      %19 = vector.extract_strided_slice %14 {offsets = [0, 2], sizes = [8, 1], strides = [1, 1]} : vector<8x6xf32> to vector<8x1xf32>
      %20 = vector.extract_strided_slice %14 {offsets = [0, 3], sizes = [8, 1], strides = [1, 1]} : vector<8x6xf32> to vector<8x1xf32>
      %21 = vector.extract_strided_slice %14 {offsets = [0, 4], sizes = [8, 1], strides = [1, 1]} : vector<8x6xf32> to vector<8x1xf32>
      %22 = vector.extract_strided_slice %14 {offsets = [0, 5], sizes = [8, 1], strides = [1, 1]} : vector<8x6xf32> to vector<8x1xf32>
      %cst = arith.constant dense<0.000000e+00> : vector<8x256xf32>
      %23 = tpu.matmul %11, %12, %cst {dimension_numbers = #tpu.dot_dimension_numbers<[1], [1], [0], [0], [0, 0, 1, 0], [], []>} : vector<8x16xbf16>, vector<256x16xbf16>, vector<8x256xf32> -> vector<8x256xf32>
      %24 = vector.broadcast %16 : vector<1x256xf32> to vector<8x256xf32>
      %25 = arith.mulf %23, %24 : vector<8x256xf32>
      %26 = vector.broadcast %18 : vector<8x1xf32> to vector<8x256xf32>
      %27 = vector.broadcast %15 : vector<1x256xf32> to vector<8x256xf32>
      %28 = arith.mulf %26, %27 : vector<8x256xf32>
      %cst_12 = arith.constant -1.500000e+01 : f32
      %cst_13 = arith.constant 1.500000e+01 : f32
      %29 = vector.broadcast %cst_12 : f32 to vector<8x256xf32>
      %30 = arith.maximumf %29, %28 : vector<8x256xf32>
      %31 = vector.broadcast %cst_13 : f32 to vector<8x256xf32>
      %32 = arith.minimumf %31, %30 : vector<8x256xf32>
      %33 = math.tanh %32 : vector<8x256xf32>
      %34 = vector.broadcast %20 : vector<8x1xf32> to vector<8x256xf32>
      %35 = arith.mulf %33, %34 : vector<8x256xf32>
      %36 = vector.broadcast %17 : vector<8x1xf32> to vector<8x256xf32>
      %37 = arith.mulf %36, %35 : vector<8x256xf32>
      %cst_14 = arith.constant 2.000000e+00 : f32
      %38 = vector.broadcast %cst_14 : f32 to vector<8x256xf32>
      %39 = arith.mulf %38, %37 : vector<8x256xf32>
      %40 = arith.mulf %39, %25 : vector<8x256xf32>
      %cst_15 = arith.constant 1.000000e+00 : f32
      %41 = vector.broadcast %cst_15 : f32 to vector<8x256xf32>
      %42 = arith.subf %41, %40 : vector<8x256xf32>
      %43 = arith.mulf %37, %35 : vector<8x256xf32>
      %44 = arith.addf %42, %43 : vector<8x256xf32>
      %45 = arith.mulf %17, %21 : vector<8x1xf32>
      %cst_16 = arith.constant 1.000000e+00 : f32
      %46 = vector.broadcast %cst_16 : f32 to vector<8x1xf32>
      %47 = arith.subf %46, %45 : vector<8x1xf32>
      %48 = vector.broadcast %47 : vector<8x1xf32> to vector<8x256xf32>
      %49 = arith.mulf %48, %35 : vector<8x256xf32>
      %50 = arith.mulf %44, %44 : vector<8x256xf32>
      %51 = vector.broadcast %21 : vector<8x1xf32> to vector<8x256xf32>
      %52 = arith.mulf %50, %51 : vector<8x256xf32>
      %53 = arith.mulf %49, %49 : vector<8x256xf32>
      %54 = arith.addf %52, %53 : vector<8x256xf32>
      %cst_17 = arith.constant 2.000000e+00 : f32
      %55 = vector.broadcast %cst_17 : f32 to vector<8x256xf32>
      %56 = arith.mulf %55, %44 : vector<8x256xf32>
      %57 = arith.mulf %56, %49 : vector<8x256xf32>
      %58 = arith.mulf %57, %25 : vector<8x256xf32>
      %59 = arith.subf %54, %58 : vector<8x256xf32>
      %cst_18 = arith.constant 0.000000e+00 : f32
      %60 = vector.broadcast %cst_18 : f32 to vector<8x256xf32>
      %61 = arith.maximumf %59, %60 : vector<8x256xf32>
      %62 = math.sqrt %61 : vector<8x256xf32>
      %cst_19 = arith.constant 2.000000e+00 : f32
      %63 = vector.broadcast %cst_19 : f32 to vector<8x256xf32>
      %64 = arith.mulf %63, %37 : vector<8x256xf32>
      %65 = arith.mulf %64, %25 : vector<8x256xf32>
      %cst_20 = arith.constant 1.000000e+00 : f32
      %66 = vector.broadcast %cst_20 : f32 to vector<8x256xf32>
      %67 = arith.subf %66, %65 : vector<8x256xf32>
      %68 = arith.mulf %37, %37 : vector<8x256xf32>
      %69 = vector.broadcast %21 : vector<8x1xf32> to vector<8x256xf32>
      %70 = arith.mulf %68, %69 : vector<8x256xf32>
      %71 = arith.addf %67, %70 : vector<8x256xf32>
      %cst_21 = arith.constant 1.000000e-15 : f32
      %72 = vector.broadcast %cst_21 : f32 to vector<8x256xf32>
      %73 = arith.maximumf %71, %72 : vector<8x256xf32>
      %74 = tpu.reciprocal %73 {approx = true} : vector<8x256xf32> -> vector<8x256xf32>
      %75 = arith.mulf %62, %74 : vector<8x256xf32>
      %76 = vector.broadcast %18 : vector<8x1xf32> to vector<8x256xf32>
      %77 = arith.mulf %76, %75 : vector<8x256xf32>
      %cst_22 = arith.constant -0.999989986 : f32
      %cst_23 = arith.constant 0.999989986 : f32
      %78 = vector.broadcast %cst_22 : f32 to vector<8x256xf32>
      %79 = arith.maximumf %78, %77 : vector<8x256xf32>
      %80 = vector.broadcast %cst_23 : f32 to vector<8x256xf32>
      %81 = arith.minimumf %80, %79 : vector<8x256xf32>
      %cst_24 = arith.constant 1.000000e+00 : f32
      %82 = vector.broadcast %cst_24 : f32 to vector<8x256xf32>
      %83 = arith.addf %82, %81 : vector<8x256xf32>
      %cst_25 = arith.constant 1.000000e+00 : f32
      %84 = vector.broadcast %cst_25 : f32 to vector<8x256xf32>
      %85 = arith.subf %84, %81 : vector<8x256xf32>
      %86 = arith.divf %83, %85 : vector<8x256xf32>
      %87 = math.log %86 : vector<8x256xf32>
      %cst_26 = arith.constant 5.000000e-01 : f32
      %88 = vector.broadcast %cst_26 : f32 to vector<8x256xf32>
      %89 = arith.mulf %88, %87 : vector<8x256xf32>
      %cst_27 = arith.constant -4.000000e+00 : f32
      %90 = vector.broadcast %cst_27 : f32 to vector<8x256xf32>
      %91 = arith.mulf %90, %89 : vector<8x256xf32>
      %92 = arith.mulf %91, %89 : vector<8x256xf32>
      %93 = vector.broadcast %19 : vector<8x1xf32> to vector<8x256xf32>
      %94 = arith.mulf %92, %93 : vector<8x256xf32>
      %c0_28 = arith.constant 0 : index
      %c0_29 = arith.constant 0 : index
      %95 = vector.load %arg8[%c0_28, %c0_29] : memref<8x256xf32, #tpu.memory_space<vmem>>, vector<8x256xf32>
      %96 = vector.broadcast %22 : vector<8x1xf32> to vector<8x256xf32>
      %97 = arith.mulf %96, %94 : vector<8x256xf32>
      %98 = arith.addf %95, %97 : vector<8x256xf32>
      %c0_30 = arith.constant 0 : index
      %c0_31 = arith.constant 0 : index
      %99 = vector.load %arg8[%c0_30, %c0_31] : memref<8x256xf32, #tpu.memory_space<vmem>>, vector<8x256xf32>
      tpu.vector_store %arg8[%c0_30, %c0_31], %98 {strides = array<i32>} : memref<8x256xf32, #tpu.memory_space<vmem>>, vector<8x256xf32>,
    } else {
    }
    return
  }
  func.func @transform_0(%arg0: i32, %arg1: memref<2xi32, #tpu.memory_space<smem>>) -> (i32, i32) {
    %c0_i32 = arith.constant 0 : i32
    %c0_i32_0 = arith.constant 0 : i32
    %c0_i32_1 = arith.constant 0 : i32
    return %c0_i32, %c0_i32_0 : i32, i32
  }
  func.func @transform_1(%arg0: i32, %arg1: memref<2xi32, #tpu.memory_space<smem>>) -> (i32, i32) {
    %c0 = arith.constant 0 : index
    %0 = memref.load %arg1[%c0] : memref<2xi32, #tpu.memory_space<smem>>
    %1 = arith.muli %arg0, %0 : i32
    %c0_i32 = arith.constant 0 : i32
    %c0_i32_0 = arith.constant 0 : i32
    return %1, %c0_i32 : i32, i32
  }
  func.func @transform_2(%arg0: i32, %arg1: memref<2xi32, #tpu.memory_space<smem>>) -> (i32, i32) {
    %c0_i32 = arith.constant 0 : i32
    %c0_i32_0 = arith.constant 0 : i32
    %c0_i32_1 = arith.constant 0 : i32
    return %c0_i32, %c0_i32_0 : i32, i32
  }
  func.func @transform_3(%arg0: i32, %arg1: memref<2xi32, #tpu.memory_space<smem>>) -> (i32, i32) {
    %c1 = arith.constant 1 : index
    %0 = memref.load %arg1[%c1] : memref<2xi32, #tpu.memory_space<smem>>
    %1 = arith.muli %arg0, %0 : i32
    %c0_i32 = arith.constant 0 : i32
    %c0_i32_0 = arith.constant 0 : i32
    return %1, %c0_i32 : i32, i32
  }
  func.func @transform_4(%arg0: i32, %arg1: memref<2xi32, #tpu.memory_space<smem>>) -> (i32, i32) {
    %c1 = arith.constant 1 : index
    %0 = memref.load %arg1[%c1] : memref<2xi32, #tpu.memory_space<smem>>
    %1 = arith.muli %arg0, %0 : i32
    %c0_i32 = arith.constant 0 : i32
    %c0_i32_0 = arith.constant 0 : i32
    return %c0_i32, %1 : i32, i32
  }
  func.func @transform_5(%arg0: i32, %arg1: memref<2xi32, #tpu.memory_space<smem>>) -> (i32, i32) {
    %c0_i32 = arith.constant 0 : i32
    %c0_i32_0 = arith.constant 0 : i32
    %c0_i32_1 = arith.constant 0 : i32
    return %c0_i32, %c0_i32_0 : i32, i32
  }
  func.func @transform_6(%arg0: i32, %arg1: memref<2xi32, #tpu.memory_space<smem>>) -> (i32, i32) {
    %c0_i32 = arith.constant 0 : i32
    %c0_i32_0 = arith.constant 0 : i32
    return %c0_i32, %arg0 : i32, i32
  }
}

</mosaic_0001>

<llo_original>
// kernel: tpu_custom_call.1
$region0: #{tpu_custom_call.1}
  #allocation0 [shape = 'u32[]', space=smem, size = 0x4, offset = 0x4, fixed_abs, tag = 'smem constant byte address 0x4 - core index']
  #allocation1 [shape = 'u32[144,128]{1,0:T(1,128)}', space=vmem, size = 0x12000, scoped, tag = 'internal scratch']
  #allocation2 [shape = 's32[1]{0}', space=sflag, size = 0x4, scoped, tag = 'scoped memory for tpu_custom_call.1']
  #allocation3 [shape = 'u8[512]{0}', space=smem, size = 0x200, scoped, tag = 'prefetched SMEM operand 0']
  %s0 = inlined_call_operand.vmem [shape: s32[2], index: 0, kind: input, shape index: {}]
  %s1 = inlined_call_operand.vmem [shape: bf16[8,64], index: 1, kind: input, shape index: {}]
  %s2 = inlined_call_operand.vmem [shape: bf16[256,64], index: 2, kind: input, shape index: {}]
  %s3 = inlined_call_operand.vmem [shape: bf16[8,16], index: 3, kind: input, shape index: {}]
  %s4 = inlined_call_operand.vmem [shape: bf16[256,16], index: 4, kind: input, shape index: {}]
  %s5 = inlined_call_operand.vmem [shape: f32[2,256], index: 5, kind: input, shape index: {}]
  %s6 = inlined_call_operand.vmem [shape: f32[8,6], index: 6, kind: input, shape index: {}]
  %s7 = inlined_call_operand.hbm [shape: f32[8,256], index: 7, kind: output, shape index: {}]
  %s8 = sld [smem:[#allocation0]]
  $region46: #{tpu_custom_call.1} parent=0
    _
  %s10 = ssub.s32 1, %s8
  %s11 = scalar_select 0, %s10, %s8
  %s12 = sshll.u32 %s0, 4
  %s13 = int_to_ptr.vmem [resolvable:$true] %s12
  %15 = dma.vmem_to_smem %s13, 16, [#allocation3], [#allocation2]
  %16 = dma.done [#allocation2], 16
  %17 = sfence
  $region1: #{tpu_custom_call.1} parent=0
    #allocation4 [shape = 'u8[8192]{0}', space=vmem, size = 0x2000, scoped, tag = 'output window, operand 0, single buffered']
    #allocation5 [shape = 's32[1]{0}', space=sflag, size = 0x4, scoped, tag = 'scoped memory for tpu_custom_call.1']
    %18 = vsyncpa [#allocation5], 0
    // Predicated region
    $region2: #{tpu_custom_call.1} parent=1 // pred_check
      _
    $region3: #{tpu_custom_call.1} parent=1 // pred_check_branch
      %20 = sbr.rel (0) target = $region5
    $region4: #{tpu_custom_call.1} parent=1 // pred_region
      _
    $region5: #{tpu_custom_call.1} parent=1 // pred_fallthru
      _
    // Predicated region
    $region6: #{tpu_custom_call.1} parent=1 // pred_check
      _
    $region7: #{tpu_custom_call.1} parent=1 // pred_check_branch
      %22 = sbr.rel (0) target = $region9
    $region8: #{tpu_custom_call.1} parent=1 // pred_region
      %s23 = sld [smem:[#allocation3]]
      %s24 = smul.u32 0, %s23
      %s25 = smul.u32 32, %s24
      %p26 = scmp.lt.s32.totalorder %s25, 31
      %s27 = scalar_select %p26, %s25, 31
      %s28 = smul.addr %s27, 4
      %s29 = scalar_lea.vmem %s2, %s28
      %s30 = sld [smem:[#allocation3]]
      %s31 = smul.u32 0, %s30
      %s32 = smul.u32 32, %s31
    $region9: #{tpu_custom_call.1} parent=1 // pred_fallthru
      _
    // Predicated region
    $region10: #{tpu_custom_call.1} parent=1 // pred_check
      _
    $region11: #{tpu_custom_call.1} parent=1 // pred_check_branch
      %34 = sbr.rel (0) target = $region13
    $region12: #{tpu_custom_call.1} parent=1 // pred_region
      _
    $region13: #{tpu_custom_call.1} parent=1 // pred_fallthru
      _
    // Predicated region
    $region14: #{tpu_custom_call.1} parent=1 // pred_check
      _
    $region15: #{tpu_custom_call.1} parent=1 // pred_check_branch
      %36 = sbr.rel (0) target = $region17
    $region16: #{tpu_custom_call.1} parent=1 // pred_region
      %s37 = sld [smem:[#allocation3 + $0x1]]
      %s38 = smul.u32 0, %s37
      %s39 = smul.u32 32, %s38
      %p40 = scmp.lt.s32.totalorder %s39, 31
      %s41 = scalar_select %p40, %s39, 31
      %s42 = smul.addr %s41, 4
      %s43 = scalar_lea.vmem %s4, %s42
      %s44 = sld [smem:[#allocation3 + $0x1]]
      %s45 = smul.u32 0, %s44
      %s46 = smul.u32 32, %s45
    $region17: #{tpu_custom_call.1} parent=1 // pred_fallthru
      _
    // Predicated region
    $region18: #{tpu_custom_call.1} parent=1 // pred_check
      _
    $region19: #{tpu_custom_call.1} parent=1 // pred_check_branch
      %48 = sbr.rel (0) target = $region21
    $region20: #{tpu_custom_call.1} parent=1 // pred_region
      %s49 = sld [smem:[#allocation3 + $0x1]]
      %s50 = smul.u32 0, %s49
      %s51 = smul.u32 2, %s50
      %p52 = scmp.lt.s32.totalorder %s51, 1
      %s53 = scalar_select %p52, %s51, 1
      %s54 = smul.addr %s53, 2
      %s55 = scalar_lea.vmem %s5, %s54
      %s56 = sld [smem:[#allocation3 + $0x1]]
      %s57 = smul.u32 0, %s56
      %s58 = smul.u32 2, %s57
    $region21: #{tpu_custom_call.1} parent=1 // pred_fallthru
      _
    // Predicated region
    $region22: #{tpu_custom_call.1} parent=1 // pred_check
      _
    $region23: #{tpu_custom_call.1} parent=1 // pred_check_branch
      %60 = sbr.rel (0) target = $region25
    $region24: #{tpu_custom_call.1} parent=1 // pred_region
      _
    $region25: #{tpu_custom_call.1} parent=1 // pred_fallthru
      _
    %s61 = sld [smem:[#allocation3]]
    %s62 = smul.u32 0, %s61
    %s63 = smul.u32 32, %s62
    %p64 = scmp.lt.s32.totalorder %s63, 31
    %s65 = scalar_select %p64, %s63, 31
    %s66 = smul.addr %s65, 4
    %s67 = scalar_lea.vmem %s2, %s66
    %s68 = sld [smem:[#allocation3 + $0x1]]
    %s69 = smul.u32 0, %s68
    %s70 = smul.u32 32, %s69
    %p71 = scmp.lt.s32.totalorder %s70, 31
    %s72 = scalar_select %p71, %s70, 31
    %s73 = smul.addr %s72, 4
    %s74 = scalar_lea.vmem %s4, %s73
    %s75 = sld [smem:[#allocation3 + $0x1]]
    %s76 = smul.u32 0, %s75
    %s77 = smul.u32 2, %s76
    %p78 = scmp.lt.s32.totalorder %s77, 1
    %s79 = scalar_select %p78, %s77, 1
    %s80 = smul.addr %s79, 2
    %s81 = scalar_lea.vmem %s5, %s80
    %s82 = sld [smem:[#allocation3]]
    %s83 = smul.u32 0, %s82
    %s84 = smul.u32 32, %s83
    %p85 = scmp.lt.s32.totalorder %s84, 31
    %s86 = scalar_select %p85, %s84, 31
    %s87 = smul.addr %s86, 4
    %s88 = scalar_lea.vmem %s2, %s87
    %s89 = sld [smem:[#allocation3]]
    %s90 = smul.u32 0, %s89
    %s91 = smul.u32 32, %s90
    %s92 = sld [smem:[#allocation3 + $0x1]]
    %s93 = smul.u32 0, %s92
    %s94 = smul.u32 32, %s93
    %p95 = scmp.lt.s32.totalorder %s94, 31
    %s96 = scalar_select %p95, %s94, 31
    %s97 = smul.addr %s96, 4
    %s98 = scalar_lea.vmem %s4, %s97
    %s99 = sld [smem:[#allocation3 + $0x1]]
    %s100 = smul.u32 0, %s99
    %s101 = smul.u32 32, %s100
    %s102 = sld [smem:[#allocation3 + $0x1]]
    %s103 = smul.u32 0, %s102
    %s104 = smul.u32 2, %s103
    %p105 = scmp.lt.s32.totalorder %s104, 1
    %s106 = scalar_select %p105, %s104, 1
    %s107 = smul.addr %s106, 2
    %s108 = scalar_lea.vmem %s5, %s107
    %s109 = sld [smem:[#allocation3 + $0x1]]
    %s110 = smul.u32 0, %s109
    %s111 = smul.u32 2, %s110
    %s113 = sld [smem:[#allocation3]]
    %p114 = scmp.ne.s32.totalorder %s113, 0
    %s115 = sld [smem:[#allocation3 + $0x1]]
    %p116 = scmp.ne.s32.totalorder %s115, 0
    // Predicated region
    $region26: #{tpu_custom_call.1} parent=1 // pred_check
      %p117 = pneg %p114
    $region27: #{tpu_custom_call.1} parent=1 // pred_check_branch
      %119 = sbr.rel (%p117) target = $region29
    $region28: #{tpu_custom_call.1} parent=1 // pred_region
      %v120 = vld [vmem:[%s1] sm:$0xf]
      %v121 = vld [vmem:[%s88] sm:$0xf]
      %v122 = vld [vmem:[%s88 + $0x4] sm:$0xf]
      %v123 = vld [vmem:[%s88 + $0x8] sm:$0xf]
      %v124 = vld [vmem:[%s88 + $0xc] sm:$0xf]
      %v125 = vld [vmem:[%s88 + $0x10] sm:$0xf]
      %v126 = vld [vmem:[%s88 + $0x14] sm:$0xf]
      %v127 = vld [vmem:[%s88 + $0x18] sm:$0xf]
      %v128 = vld [vmem:[%s88 + $0x1c] sm:$0xf]
      %v129 = vld [vmem:[%s88 + $0x20] sm:$0xf]
      %v130 = vld [vmem:[%s88 + $0x24] sm:$0xf]
      %v131 = vld [vmem:[%s88 + $0x28] sm:$0xf]
      %v132 = vld [vmem:[%s88 + $0x2c] sm:$0xf]
      %v133 = vld [vmem:[%s88 + $0x30] sm:$0xf]
      %v134 = vld [vmem:[%s88 + $0x34] sm:$0xf]
      %v135 = vld [vmem:[%s88 + $0x38] sm:$0xf]
      %v136 = vld [vmem:[%s88 + $0x3c] sm:$0xf]
      %v137 = vld [vmem:[%s88 + $0x40] sm:$0xf]
      %v138 = vld [vmem:[%s88 + $0x44] sm:$0xf]
      %v139 = vld [vmem:[%s88 + $0x48] sm:$0xf]
      %v140 = vld [vmem:[%s88 + $0x4c] sm:$0xf]
      %v141 = vld [vmem:[%s88 + $0x50] sm:$0xf]
      %v142 = vld [vmem:[%s88 + $0x54] sm:$0xf]
      %v143 = vld [vmem:[%s88 + $0x58] sm:$0xf]
      %v144 = vld [vmem:[%s88 + $0x5c] sm:$0xf]
      %v145 = vld [vmem:[%s88 + $0x60] sm:$0xf]
      %v146 = vld [vmem:[%s88 + $0x64] sm:$0xf]
      %v147 = vld [vmem:[%s88 + $0x68] sm:$0xf]
      %v148 = vld [vmem:[%s88 + $0x6c] sm:$0xf]
      %v149 = vld [vmem:[%s88 + $0x70] sm:$0xf]
      %v150 = vld [vmem:[%s88 + $0x74] sm:$0xf]
      %v151 = vld [vmem:[%s88 + $0x78] sm:$0xf]
      %v152 = vld [vmem:[%s88 + $0x7c] sm:$0xf]
      %v185 = vunpack.c.l.b16 %v121
      %v186 = vunpack.c.l.b16 %v122
      %v187 = vunpack.c.l.b16 %v123
      %v188 = vunpack.c.l.b16 %v124
      %v189 = vunpack.c.l.b16 %v125
      %v190 = vunpack.c.l.b16 %v126
      %v191 = vunpack.c.l.b16 %v127
      %v192 = vunpack.c.l.b16 %v128
      %v193 = vunpack.c.l.b16 %v129
      %v194 = vunpack.c.l.b16 %v130
      %v195 = vunpack.c.l.b16 %v131
      %v196 = vunpack.c.l.b16 %v132
      %v197 = vunpack.c.l.b16 %v133
      %v198 = vunpack.c.l.b16 %v134
      %v199 = vunpack.c.l.b16 %v135
      %v200 = vunpack.c.l.b16 %v136
      %v201 = vunpack.c.l.b16 %v137
      %v202 = vunpack.c.l.b16 %v138
      %v203 = vunpack.c.l.b16 %v139
      %v204 = vunpack.c.l.b16 %v140
      %v205 = vunpack.c.l.b16 %v141
      %v206 = vunpack.c.l.b16 %v142
      %v207 = vunpack.c.l.b16 %v143
      %v208 = vunpack.c.l.b16 %v144
      %v209 = vunpack.c.l.b16 %v145
      %v210 = vunpack.c.l.b16 %v146
      %v211 = vunpack.c.l.b16 %v147
      %v212 = vunpack.c.l.b16 %v148
      %v213 = vunpack.c.l.b16 %v149
      %v214 = vunpack.c.l.b16 %v150
      %v215 = vunpack.c.l.b16 %v151
      %v216 = vunpack.c.l.b16 %v152
      %v217 = vpack.c.b16 %v186, %v185
      %v218 = vpack.c.b16 %v188, %v187
      %v219 = vpack.c.b16 %v190, %v189
      %v220 = vpack.c.b16 %v192, %v191
      %v221 = vpack.c.b16 %v194, %v193
      %v222 = vpack.c.b16 %v196, %v195
      %v223 = vpack.c.b16 %v198, %v197
      %v224 = vpack.c.b16 %v200, %v199
      %v225 = vpack.c.b16 %v202, %v201
      %v226 = vpack.c.b16 %v204, %v203
      %v227 = vpack.c.b16 %v206, %v205
      %v228 = vpack.c.b16 %v208, %v207
      %v229 = vpack.c.b16 %v210, %v209
      %v230 = vpack.c.b16 %v212, %v211
      %v231 = vpack.c.b16 %v214, %v213
      %v232 = vpack.c.b16 %v216, %v215
      %vm233 = vcmask 523264
      %v235 = vsel %vm233, %v120, 0
      %v238 = vsel %vm233, %v217, 0
      %v241 = vsel %vm233, %v218, 0
      %v244 = vsel %vm233, %v219, 0
      %v247 = vsel %vm233, %v220, 0
      %v250 = vsel %vm233, %v221, 0
      %v253 = vsel %vm233, %v222, 0
      %v256 = vsel %vm233, %v223, 0
      %v259 = vsel %vm233, %v224, 0
      %v262 = vsel %vm233, %v225, 0
      %v265 = vsel %vm233, %v226, 0
      %v268 = vsel %vm233, %v227, 0
      %v271 = vsel %vm233, %v228, 0
      %v274 = vsel %vm233, %v229, 0
      %v277 = vsel %vm233, %v230, 0
      %v280 = vsel %vm233, %v231, 0
      %v283 = vsel %vm233, %v232, 0
      %285 = vmatprep.subr.bf16.mxu0 0
      %286 = vmatpush1.bf16.xpose.msra.mxu0 %v259
      %287 = vmatprep.subr.bf16.mxu0 0
      %288 = vmatpush1.bf16.xpose.msra.mxu0 %v256
      %289 = vmatprep.subr.bf16.mxu0 0
      %290 = vmatpush1.bf16.xpose.msra.mxu0 %v253
      %291 = vmatprep.subr.bf16.mxu0 0
      %292 = vmatpush1.bf16.xpose.msra.mxu0 %v250
      %293 = vmatprep.subr.bf16.mxu0 0
      %294 = vmatpush1.bf16.xpose.msra.mxu0 %v247
      %295 = vmatprep.subr.bf16.mxu0 0
      %296 = vmatpush1.bf16.xpose.msra.mxu0 %v244
      %297 = vmatprep.subr.bf16.mxu0 0
      %298 = vmatpush1.bf16.xpose.msra.mxu0 %v241
      %299 = vmatprep.subr.bf16.mxu0 0
      %300 = vmatpush1.bf16.xpose.msra.mxu0 %v238
      %301 = vmatprep.subr.bf16.mxu0 0
      %302 = vmatpush2.bf16.xpose.msra.mxu0 %v283
      %303 = vmatprep.subr.bf16.mxu0 0
      %304 = vmatpush2.bf16.xpose.msra.mxu0 %v280
      %305 = vmatprep.subr.bf16.mxu0 0
      %306 = vmatpush2.bf16.xpose.msra.mxu0 %v277
      %307 = vmatprep.subr.bf16.mxu0 0
      %308 = vmatpush2.bf16.xpose.msra.mxu0 %v274
      %309 = vmatprep.subr.bf16.mxu0 0
      %310 = vmatpush2.bf16.xpose.msra.mxu0 %v271
      %311 = vmatprep.subr.bf16.mxu0 0
      %312 = vmatpush2.bf16.xpose.msra.mxu0 %v268
      %313 = vmatprep.subr.bf16.mxu0 0
      %314 = vmatpush2.bf16.xpose.msra.mxu0 %v265
      %315 = vmatprep.subr.bf16.mxu0 0
      %316 = vmatpush2.bf16.xpose.msra.mxu0 %v262
      %317 = vmatprep.mubr.bf16.mxu0 0
      %318 = vmatmul.mubr.bf16.gmra.mxu0 %v235
      %v319 = vpop.f32.mrf.mxu0
      %v320 = vadd.f32 0.0, %v319
      %v321 = vpop.f32.mrf.mxu0
      %v322 = vadd.f32 0.0, %v321
      %v323 = vpop.f32.mrf.mxu0
      %v324 = vpop.f32.mrf.mxu0
      %325 = vdwg.mxu0
      %326 = vst [vmem:[#allocation4] sm:$0xff] %v320
      %327 = vst [vmem:[#allocation4 + $0x8] sm:$0xff] %v322
    $region29: #{tpu_custom_call.1} parent=1 // pred_fallthru
      _
    %p328 = scmp.eq.s32.totalorder %s113, 0
    // Predicated region
    $region30: #{tpu_custom_call.1} parent=1 // pred_check
      %p329 = pneg %p328
    $region31: #{tpu_custom_call.1} parent=1 // pred_check_branch
      %331 = sbr.rel (%p329) target = $region33
    $region32: #{tpu_custom_call.1} parent=1 // pred_region
      %332 = vst [vmem:[#allocation4] sm:$0xff] 0.0
      %333 = vst [vmem:[#allocation4 + $0x8] sm:$0xff] 0.0
    $region33: #{tpu_custom_call.1} parent=1 // pred_fallthru
      _
    // Predicated region
    $region34: #{tpu_custom_call.1} parent=1 // pred_check
      %p334 = pneg %p116
    $region35: #{tpu_custom_call.1} parent=1 // pred_check_branch
      %336 = sbr.rel (%p334) target = $region37
    $region36: #{tpu_custom_call.1} parent=1 // pred_region
      %v337 = vld [vmem:[%s3] sm:$0xf]
      %v338 = vld [vmem:[%s98] sm:$0xf]
      %v339 = vld [vmem:[%s98 + $0x4] sm:$0xf]
      %v340 = vld [vmem:[%s98 + $0x8] sm:$0xf]
      %v341 = vld [vmem:[%s98 + $0xc] sm:$0xf]
      %v342 = vld [vmem:[%s98 + $0x10] sm:$0xf]
      %v343 = vld [vmem:[%s98 + $0x14] sm:$0xf]
      %v344 = vld [vmem:[%s98 + $0x18] sm:$0xf]
      %v345 = vld [vmem:[%s98 + $0x1c] sm:$0xf]
      %v346 = vld [vmem:[%s98 + $0x20] sm:$0xf]
      %v347 = vld [vmem:[%s98 + $0x24] sm:$0xf]
      %v348 = vld [vmem:[%s98 + $0x28] sm:$0xf]
      %v349 = vld [vmem:[%s98 + $0x2c] sm:$0xf]
      %v350 = vld [vmem:[%s98 + $0x30] sm:$0xf]
      %v351 = vld [vmem:[%s98 + $0x34] sm:$0xf]
      %v352 = vld [vmem:[%s98 + $0x38] sm:$0xf]
      %v353 = vld [vmem:[%s98 + $0x3c] sm:$0xf]
      %v354 = vld [vmem:[%s98 + $0x40] sm:$0xf]
      %v355 = vld [vmem:[%s98 + $0x44] sm:$0xf]
      %v356 = vld [vmem:[%s98 + $0x48] sm:$0xf]
      %v357 = vld [vmem:[%s98 + $0x4c] sm:$0xf]
      %v358 = vld [vmem:[%s98 + $0x50] sm:$0xf]
      %v359 = vld [vmem:[%s98 + $0x54] sm:$0xf]
      %v360 = vld [vmem:[%s98 + $0x58] sm:$0xf]
      %v361 = vld [vmem:[%s98 + $0x5c] sm:$0xf]
      %v362 = vld [vmem:[%s98 + $0x60] sm:$0xf]
      %v363 = vld [vmem:[%s98 + $0x64] sm:$0xf]
      %v364 = vld [vmem:[%s98 + $0x68] sm:$0xf]
      %v365 = vld [vmem:[%s98 + $0x6c] sm:$0xf]
      %v366 = vld [vmem:[%s98 + $0x70] sm:$0xf]
      %v367 = vld [vmem:[%s98 + $0x74] sm:$0xf]
      %v368 = vld [vmem:[%s98 + $0x78] sm:$0xf]
      %v369 = vld [vmem:[%s98 + $0x7c] sm:$0xf]
      %v370 = vld [vmem:[%s108] sm:$0xf]
      %v371 = vld [vmem:[%s6] sm:$0xff]
      %v404 = vunpack.c.l.b16 %v338
      %v405 = vunpack.c.l.b16 %v339
      %v406 = vunpack.c.l.b16 %v340
      %v407 = vunpack.c.l.b16 %v341
      %v408 = vunpack.c.l.b16 %v342
      %v409 = vunpack.c.l.b16 %v343
      %v410 = vunpack.c.l.b16 %v344
      %v411 = vunpack.c.l.b16 %v345
      %v412 = vunpack.c.l.b16 %v346
      %v413 = vunpack.c.l.b16 %v347
      %v414 = vunpack.c.l.b16 %v348
      %v415 = vunpack.c.l.b16 %v349
      %v416 = vunpack.c.l.b16 %v350
      %v417 = vunpack.c.l.b16 %v351
      %v418 = vunpack.c.l.b16 %v352
      %v419 = vunpack.c.l.b16 %v353
      %v420 = vunpack.c.l.b16 %v354
      %v421 = vunpack.c.l.b16 %v355
      %v422 = vunpack.c.l.b16 %v356
      %v423 = vunpack.c.l.b16 %v357
      %v424 = vunpack.c.l.b16 %v358
      %v425 = vunpack.c.l.b16 %v359
      %v426 = vunpack.c.l.b16 %v360
      %v427 = vunpack.c.l.b16 %v361
      %v428 = vunpack.c.l.b16 %v362
      %v429 = vunpack.c.l.b16 %v363
      %v430 = vunpack.c.l.b16 %v364
      %v431 = vunpack.c.l.b16 %v365
      %v432 = vunpack.c.l.b16 %v366
      %v433 = vunpack.c.l.b16 %v367
      %v434 = vunpack.c.l.b16 %v368
      %v435 = vunpack.c.l.b16 %v369
      %v436 = vpack.c.b16 %v405, %v404
      %v437 = vpack.c.b16 %v407, %v406
      %v438 = vpack.c.b16 %v409, %v408
      %v439 = vpack.c.b16 %v411, %v410
      %v440 = vpack.c.b16 %v413, %v412
      %v441 = vpack.c.b16 %v415, %v414
      %v442 = vpack.c.b16 %v417, %v416
      %v443 = vpack.c.b16 %v419, %v418
      %v444 = vpack.c.b16 %v421, %v420
      %v445 = vpack.c.b16 %v423, %v422
      %v446 = vpack.c.b16 %v425, %v424
      %v447 = vpack.c.b16 %v427, %v426
      %v448 = vpack.c.b16 %v429, %v428
      %v449 = vpack.c.b16 %v431, %v430
      %v450 = vpack.c.b16 %v433, %v432
      %v451 = vpack.c.b16 %v435, %v434
      %vm452 = vcmask 130048
      %v454 = vsel %vm452, %v337, 0
      %v457 = vsel %vm452, %v436, 0
      %v460 = vsel %vm452, %v437, 0
      %v463 = vsel %vm452, %v438, 0
      %v466 = vsel %vm452, %v439, 0
      %v469 = vsel %vm452, %v440, 0
      %v472 = vsel %vm452, %v441, 0
      %v475 = vsel %vm452, %v442, 0
      %v478 = vsel %vm452, %v443, 0
      %v481 = vsel %vm452, %v444, 0
      %v484 = vsel %vm452, %v445, 0
      %v487 = vsel %vm452, %v446, 0
      %v490 = vsel %vm452, %v447, 0
      %v493 = vsel %vm452, %v448, 0
      %v496 = vsel %vm452, %v449, 0
      %v499 = vsel %vm452, %v450, 0
      %v502 = vsel %vm452, %v451, 0
      %504 = vmatprep.subr.bf16.mxu0 0
      %505 = vmatpush1.bf16.xpose.msra.mxu0 %v478
      %506 = vmatprep.subr.bf16.mxu0 0
      %507 = vmatpush1.bf16.xpose.msra.mxu0 %v475
      %508 = vmatprep.subr.bf16.mxu0 0
      %509 = vmatpush1.bf16.xpose.msra.mxu0 %v472
      %510 = vmatprep.subr.bf16.mxu0 0
      %511 = vmatpush1.bf16.xpose.msra.mxu0 %v469
      %512 = vmatprep.subr.bf16.mxu0 0
      %513 = vmatpush1.bf16.xpose.msra.mxu0 %v466
      %514 = vmatprep.subr.bf16.mxu0 0
      %515 = vmatpush1.bf16.xpose.msra.mxu0 %v463
      %516 = vmatprep.subr.bf16.mxu0 0
      %517 = vmatpush1.bf16.xpose.msra.mxu0 %v460
      %518 = vmatprep.subr.bf16.mxu0 0
      %519 = vmatpush1.bf16.xpose.msra.mxu0 %v457
      %520 = vmatprep.subr.bf16.mxu0 0
      %521 = vmatpush2.bf16.xpose.msra.mxu0 %v502
      %522 = vmatprep.subr.bf16.mxu0 0
      %523 = vmatpush2.bf16.xpose.msra.mxu0 %v499
      %524 = vmatprep.subr.bf16.mxu0 0
      %525 = vmatpush2.bf16.xpose.msra.mxu0 %v496
      %526 = vmatprep.subr.bf16.mxu0 0
      %527 = vmatpush2.bf16.xpose.msra.mxu0 %v493
      %528 = vmatprep.subr.bf16.mxu0 0
      %529 = vmatpush2.bf16.xpose.msra.mxu0 %v490
      %530 = vmatprep.subr.bf16.mxu0 0
      %531 = vmatpush2.bf16.xpose.msra.mxu0 %v487
      %532 = vmatprep.subr.bf16.mxu0 0
      %533 = vmatpush2.bf16.xpose.msra.mxu0 %v484
      %534 = vmatprep.subr.bf16.mxu0 0
      %535 = vmatpush2.bf16.xpose.msra.mxu0 %v481
      %536 = vmatprep.mubr.bf16.mxu0 0
      %537 = vmatmul.mubr.bf16.gmra.mxu0 %v454
      %v538 = vpop.f32.mrf.mxu0
      %v539 = vadd.f32 0.0, %v538
      %v540 = vpop.f32.mrf.mxu0
      %v541 = vadd.f32 0.0, %v540
      %v542 = vpop.f32.mrf.mxu0
      %v543 = vpop.f32.mrf.mxu0
      %544 = vdwg.mxu0
      %v546 = vlaneseq
      %v547 = vshrl.u32 %v546, 7
      %v548 = vsub.s32 1, %v547
      %v549 = vrot.slane %v370, %v548
      %v550 = vlaneseq
      %v551 = vshrl.u32 %v550, 7
      %v552 = vsub.s32 3, %v551
      %v553 = vrot.slane %v370, %v552
      %v556 = vlaneseq
      %v557 = vshrl.u32 %v556, 7
      %v558 = vsub.s32 1, %v557
      %v559 = vrot.slane %v549, %v558
      %v560 = vlaneseq
      %v561 = vshrl.u32 %v560, 7
      %v562 = vsub.s32 1, %v561
      %v563 = vrot.slane %v553, %v562
      %v564 = vmul.f32 %v539, %v559
      %v565 = vmul.f32 %v541, %v563
      %567 = vset.pattern.permute.xlu0 1
      %568 = vperm.xlu0 %567, %v371
      %v569 = vpop.permute.xlu0 %568
      %v571 = vlaneseq
      %v572 = vshrl.u32 %v571, 7
      %v573 = vsub.s32 0, %v572
      %v574 = vrot.slane %v370, %v573
      %v575 = vlaneseq
      %v576 = vshrl.u32 %v575, 7
      %v577 = vsub.s32 2, %v576
      %v578 = vrot.slane %v370, %v577
      %v581 = vlaneseq
      %v582 = vshrl.u32 %v581, 7
      %v583 = vsub.s32 0, %v582
      %v584 = vrot.slane %v574, %v583
      %v585 = vlaneseq
      %v586 = vshrl.u32 %v585, 7
      %v587 = vsub.s32 0, %v586
      %v588 = vrot.slane %v578, %v587
      %v589 = vmul.f32 %v569, %v584
      %v590 = vmul.f32 %v569, %v588
      %v591 = vmax.f32 %v589, -15.0
      %v592 = vmax.f32 %v590, -15.0
      %v593 = vmin.f32 %v591, 15.0
      %v594 = vmin.f32 %v592, 15.0
      %v595 = vtanh.pop %v593
      %v596 = vtanh.pop %v594
      %597 = vset.pattern.permute.xlu0 3
      %598 = vperm.xlu0 %597, %v371
      %v599 = vpop.permute.xlu0 %598
      %v601 = vmul.f32 %v595, %v599
      %v602 = vmul.f32 %v596, %v599
      %603 = vset.pattern.permute.xlu0 0
      %604 = vperm.xlu0 %603, %v371
      %v605 = vpop.permute.xlu0 %604
      %v607 = vmul.f32 %v605, %v601
      %v608 = vmul.f32 %v605, %v602
      %v609 = vmul.f32 %v607, 2.0
      %v610 = vmul.f32 %v608, 2.0
      %v611 = vmul.f32 %v609, %v564
      %v612 = vmul.f32 %v610, %v565
      %v613 = vsub.f32 1.0, %v611
      %v614 = vsub.f32 1.0, %v612
      %v615 = vmul.f32 %v607, %v601
      %v616 = vmul.f32 %v608, %v602
      %v617 = vadd.f32 %v613, %v615
      %v618 = vadd.f32 %v614, %v616
      %619 = vrot.lane.b32.xlu0 %v371, 124
      %v620 = vpop.permute.xlu0 %619
      %v622 = vmul.f32 %v371, %v620
      %v623 = vsub.f32 1.0, %v622
      %625 = vset.pattern.permute.xlu0 0
      %626 = vperm.xlu0 %625, %v623
      %v627 = vpop.permute.xlu0 %626
      %v629 = vmul.f32 %v627, %v601
      %v630 = vmul.f32 %v627, %v602
      %v631 = vmul.f32 %v617, %v617
      %v632 = vmul.f32 %v618, %v618
      %633 = vset.pattern.permute.xlu0 4
      %634 = vperm.xlu0 %633, %v371
      %v635 = vpop.permute.xlu0 %634
      %v637 = vmul.f32 %v631, %v635
      %v638 = vmul.f32 %v632, %v635
      %v639 = vmul.f32 %v629, %v629
      %v640 = vmul.f32 %v630, %v630
      %v641 = vadd.f32 %v637, %v639
      %v642 = vadd.f32 %v638, %v640
      %v643 = vmul.f32 %v617, 2.0
      %v644 = vmul.f32 %v618, 2.0
      %v645 = vmul.f32 %v643, %v629
      %v646 = vmul.f32 %v644, %v630
      %v647 = vmul.f32 %v645, %v564
      %v648 = vmul.f32 %v646, %v565
      %v649 = vsub.f32 %v641, %v647
      %v650 = vsub.f32 %v642, %v648
      %v651 = vmax.f32 %v649, 0.0
      %v652 = vmax.f32 %v650, 0.0
      %v653 = vrsqrt.pop %v651
      %v654 = vmul.f32 %v651, %v653
      %vm655 = vcmp.eq.f32.partialorder %v651, inf
      %v656 = vsel %vm655, %v651, %v654
      %vm657 = vcmp.eq.f32.partialorder %v651, 0.0
      %v658 = vand.u32 %v651, 2147483648
      %v659 = vsel %vm657, %v658, %v656
      %v660 = vrsqrt.pop %v652
      %v661 = vmul.f32 %v652, %v660
      %vm662 = vcmp.eq.f32.partialorder %v652, inf
      %v663 = vsel %vm662, %v652, %v661
      %vm664 = vcmp.eq.f32.partialorder %v652, 0.0
      %v665 = vand.u32 %v652, 2147483648
      %v666 = vsel %vm664, %v665, %v663
      %v667 = vmul.f32 %v607, %v607
      %v668 = vmul.f32 %v608, %v608
      %v669 = vmul.f32 %v667, %v635
      %v670 = vmul.f32 %v668, %v635
      %v671 = vadd.f32 %v613, %v669
      %v672 = vadd.f32 %v614, %v670
      %v673 = vmax.f32 %v671, 1e-15
      %v674 = vmax.f32 %v672, 1e-15
      %v675 = vrcp.pop %v673
      %v676 = vrcp.pop %v674
      %v677 = vmul.f32 %v659, %v675
      %v678 = vmul.f32 %v666, %v676
      %v679 = vmul.f32 %v569, %v677
      %v680 = vmul.f32 %v569, %v678
      %v681 = vmax.f32 %v679, -0.99999
      %v682 = vmax.f32 %v680, -0.99999
      %v683 = vmin.f32 %v681, 0.99999
      %v684 = vmin.f32 %v682, 0.99999
      %v685 = vadd.f32 %v683, 1.0
      %v686 = vadd.f32 %v684, 1.0
      %v687 = vsub.f32 1.0, %v683
      %v688 = vsub.f32 1.0, %v684
      %v689 = vrcp.pop %v687
      %v690 = vmul.f32 %v685, %v689
      %v691 = vrcp.pop %v688
      %v692 = vmul.f32 %v686, %v691
      %v693 = vlog2.pop %v690
      %v694 = vmul.f32 %v693, 0.6931472
      %v695 = vlog2.pop %v692
      %v696 = vmul.f32 %v695, 0.6931472
      %v697 = vmul.f32 %v694, 0.5
      %v698 = vmul.f32 %v696, 0.5
      %v699 = vmul.f32 %v697, -4.0
      %v700 = vmul.f32 %v698, -4.0
      %v701 = vmul.f32 %v699, %v697
      %v702 = vmul.f32 %v700, %v698
      %703 = vset.pattern.permute.xlu0 2
      %704 = vperm.xlu0 %703, %v371
      %v705 = vpop.permute.xlu0 %704
      %v707 = vmul.f32 %v701, %v705
      %v708 = vmul.f32 %v702, %v705
      %v709 = vld [vmem:[#allocation4] sm:$0xff]
      %v710 = vld [vmem:[#allocation4 + $0x8] sm:$0xff]
      %711 = vset.pattern.permute.xlu0 5
      %712 = vperm.xlu0 %711, %v371
      %v713 = vpop.permute.xlu0 %712
      %v715 = vmul.f32 %v713, %v707
      %v716 = vmul.f32 %v713, %v708
      %v717 = vadd.f32 %v709, %v715
      %v718 = vadd.f32 %v710, %v716
      %719 = vst [vmem:[#allocation4] sm:$0xff] %v717
      %720 = vst [vmem:[#allocation4 + $0x8] sm:$0xff] %v718
    $region37: #{tpu_custom_call.1} parent=1 // pred_fallthru
      _
    // Predicated region
    $region38: #{tpu_custom_call.1} parent=1 // pred_check
      _
    $region39: #{tpu_custom_call.1} parent=1 // pred_check_branch
      %722 = sbr.rel (0) target = $region41
    $region40: #{tpu_custom_call.1} parent=1 // pred_region
      %s724 = ssub.s32 256, 256
      %725 = vsyncadd [#allocation5], %s724
      %s727 = sshll.u32 [#allocation4], 4
      %s728 = int_to_ptr.vmem [resolvable:$true] %s727
      %730 = dma.vmem_to_hbm [thread:$0]  %s728, 256, %s7, [#allocation5]
    $region41: #{tpu_custom_call.1} parent=1 // pred_fallthru
      _
    // Predicated region
    $region42: #{tpu_custom_call.1} parent=1 // pred_check
      _
    $region43: #{tpu_custom_call.1} parent=1 // pred_check_branch
      %732 = sbr.rel (0) target = $region45
    $region44: #{tpu_custom_call.1} parent=1 // pred_region
      %733 = dma.done [#allocation5], 256
    $region45: #{tpu_custom_call.1} parent=1 // pred_fallthru
      _
    %734 = vsyncpa [#allocation5], 1

</llo_original>
